<compile_context>
chip_gen: v6e
topology: v6e:2x2x1
jax: 0.10.0
libtpu: 0.0.40
codegen_flags: <defaults>
</compile_context>

<pallas_src>
import functools

import jax
import jax.numpy as jnp
from jax.experimental import pallas as pl
from jax.experimental.pallas import tpu as pltpu


def _cond_broadcast_kernel(x_ref, o_ref, *, alpha):
    # x_ref: (tile_rows, 1) ; o_ref: (tile_rows, sz*sz)
    # Scale + cast on the small input first, then lane-splat to the big tile.
    x = (x_ref[...].astype(jnp.float32) * jnp.float32(alpha)).astype(o_ref.dtype)
    o_ref[...] = jnp.broadcast_to(x, o_ref.shape)


def cond_broadcast(x, size, alpha=1.0, *, tile_rows=None):
    """x: (B, C) array -> (B, C, size, size), same dtype as x."""
    b, c = x.shape
    rows = b * c
    spatial = size * size
    dtype_bytes = jnp.dtype(x.dtype).itemsize

    # Pick a row tile: multiple of 8 sublanes, output tile ~<= 2 MiB so a
    # double-buffered pair stays far below every generation's scoped VMEM.
    if tile_rows is None:
        target_bytes = 2 * 1024 * 1024
        rows_by_bytes = max(8, target_bytes // (spatial * dtype_bytes))
        tile_rows = min(rows, int(rows_by_bytes))
    tile_rows = min(tile_rows, rows)
    if rows % 8 == 0:
        tile_rows = max(8, (tile_rows // 8) * 8)
    else:
        # Small / odd row counts: use the full extent (always a legal block).
        tile_rows = rows

    grid = (pl.cdiv(rows, tile_rows),)

    # NOTE: sz*sz should ideally be a multiple of 128 lanes (sz=16 -> 256 is
    # ideal); smaller sizes still run correctly, just with masked stores.
    # TODO(synk): repack (rows, sz*sz) into a 128-lane-multiple slab for sz<12.

    x2d = x.reshape(rows, 1)

    cost = pl.CostEstimate(
        flops=rows,
        transcendentals=0,
        bytes_accessed=rows * dtype_bytes + rows * spatial * dtype_bytes,
    )

    flat = pl.pallas_call(
        functools.partial(_cond_broadcast_kernel, alpha=alpha),
        out_shape=jax.ShapeDtypeStruct((rows, spatial), x.dtype),
        grid_spec=pltpu.PrefetchScalarGridSpec(
            num_scalar_prefetch=0,
            grid=grid,
            in_specs=[pl.BlockSpec((tile_rows, 1), lambda i: (i, 0))],
            out_specs=pl.BlockSpec((tile_rows, spatial), lambda i: (i, 0)),
        ),
        compiler_params=pltpu.CompilerParams(
            dimension_semantics=("parallel",),
        ),
        cost_estimate=cost,
    )(x2d)

    return flat.reshape(b, c, size, size)


def _reference(x, size, alpha):
    b, c = x.shape
    return jnp.broadcast_to((x * alpha)[:, :, None, None], (b, c, size, size))


if __name__ == "__main__":
    key = jax.random.PRNGKey(0)
    B, C, SZ = 2, 4, 16
    ALPHA = 1.5

    x = jax.random.normal(key, (B, C), dtype=jnp.float32)

    out = cond_broadcast(x, SZ, alpha=ALPHA)
    out = jax.block_until_ready(out)

    ref = _reference(x, SZ, ALPHA)
    assert out.shape == (B, C, SZ, SZ), out.shape
    assert out.dtype == x.dtype
    assert jnp.allclose(out, ref, atol=1e-6, rtol=1e-6)

    # Exercise the gridded / multi-tile path (rows=32 split into 8-row tiles).
    key2 = jax.random.PRNGKey(1)
    x2 = jax.random.normal(key2, (4, 8), dtype=jnp.float32)
    out2 = jax.block_until_ready(cond_broadcast(x2, SZ, alpha=ALPHA, tile_rows=8))
    ref2 = _reference(x2, SZ, ALPHA)
    assert out2.shape == (4, 8, SZ, SZ)
    assert jnp.allclose(out2, ref2, atol=1e-6, rtol=1e-6)

    print("KERNEL_OK")
</pallas_src>

<mosaic_0001>
module attributes {stable_mosaic.version = 11 : i64} {
  func.func @_cond_broadcast_kernel(%arg0: i32, %arg1: memref<8x1xf32, #tpu.memory_space<vmem>>, %arg2: memref<8x256xf32, #tpu.memory_space<vmem>>) attributes {dimension_semantics = [#tpu.dimension_semantics<parallel>], iteration_bounds = array<i64: 1>, scalar_prefetch = 0 : i64, scratch_operands = 0 : i64, tpu.core_type = #tpu.core_type<tc>, window_params = [{transform_indices = @transform_0, window_bounds = array<i64: 8, 1>}, {transform_indices = @transform_1, window_bounds = array<i64: 8, 256>}]} {
    %c0 = arith.constant 0 : index
    %c0_0 = arith.constant 0 : index
    %0 = vector.load %arg1[%c0, %c0_0] : memref<8x1xf32, #tpu.memory_space<vmem>>, vector<8x1xf32>
    %cst = arith.constant 1.500000e+00 : f32
    %1 = vector.broadcast %cst : f32 to vector<8x1xf32>
    %2 = arith.mulf %0, %1 : vector<8x1xf32>
    %3 = vector.shape_cast %2 : vector<8x1xf32> to vector<8x1xf32>
    %4 = vector.broadcast %3 : vector<8x1xf32> to vector<8x256xf32>
    %c0_1 = arith.constant 0 : index
    %c0_2 = arith.constant 0 : index
    %5 = vector.load %arg2[%c0_1, %c0_2] : memref<8x256xf32, #tpu.memory_space<vmem>>, vector<8x256xf32>
    tpu.vector_store %arg2[%c0_1, %c0_2], %4 {strides = array<i32>} : memref<8x256xf32, #tpu.memory_space<vmem>>, vector<8x256xf32>,
    return
  }
  func.func @transform_0(%arg0: i32) -> (i32, i32) {
    %c0_i32 = arith.constant 0 : i32
    %c0_i32_0 = arith.constant 0 : i32
    return %arg0, %c0_i32 : i32, i32
  }
  func.func @transform_1(%arg0: i32) -> (i32, i32) {
    %c0_i32 = arith.constant 0 : i32
    %c0_i32_0 = arith.constant 0 : i32
    return %arg0, %c0_i32 : i32, i32
  }
}

</mosaic_0001>

<llo_original>
// kernel: tpu_custom_call.1
$region0: #{tpu_custom_call.1}
  #allocation0 [shape = 'u32[]', space=smem, size = 0x4, offset = 0x4, fixed_abs, tag = 'smem constant byte address 0x4 - core index']
  #allocation1 [shape = 'u32[144,128]{1,0:T(1,128)}', space=vmem, size = 0x12000, scoped, tag = 'internal scratch']
  %s0 = inlined_call_operand.vmem [shape: f32[8,1], index: 0, kind: input, shape index: {}]
  %s1 = inlined_call_operand.hbm [shape: f32[8,256], index: 1, kind: output, shape index: {}]
  %s2 = sld [smem:[#allocation0]]
  $region14: #{tpu_custom_call.1} parent=0
    _
  %s4 = ssub.s32 1, %s2
  %s5 = scalar_select 0, %s4, %s2
  $region1: #{tpu_custom_call.1} parent=0
    #allocation2 [shape = 'u8[8192]{0}', space=vmem, size = 0x2000, scoped, tag = 'output window, operand 0, single buffered']
    #allocation3 [shape = 's32[1]{0}', space=sflag, size = 0x4, scoped, tag = 'scoped memory for tpu_custom_call.1']
    %6 = vsyncpa [#allocation3], 0
    // Predicated region
    $region2: #{tpu_custom_call.1} parent=1 // pred_check
      _
    $region3: #{tpu_custom_call.1} parent=1 // pred_check_branch
      %8 = sbr.rel (0) target = $region5
    $region4: #{tpu_custom_call.1} parent=1 // pred_region
      _
    $region5: #{tpu_custom_call.1} parent=1 // pred_fallthru
      _
    %v9 = vld [vmem:[%s0] sm:$0xff]
    %v10 = vmul.f32 %v9, 1.5
    %12 = vset.pattern.permute.xlu0 0
    %13 = vperm.xlu0 %12, %v10
    %v14 = vpop.permute.xlu0 %13
    %16 = vst [vmem:[#allocation2] sm:$0xff] %v14
    %17 = vst [vmem:[#allocation2 + $0x8] sm:$0xff] %v14
    // Predicated region
    $region6: #{tpu_custom_call.1} parent=1 // pred_check
      _
    $region7: #{tpu_custom_call.1} parent=1 // pred_check_branch
      %19 = sbr.rel (0) target = $region9
    $region8: #{tpu_custom_call.1} parent=1 // pred_region
      %s21 = ssub.s32 256, 256
      %22 = vsyncadd [#allocation3], %s21
      %s24 = sshll.u32 [#allocation2], 4
      %s25 = int_to_ptr.vmem [resolvable:$true] %s24
      %27 = dma.vmem_to_hbm [thread:$0]  %s25, 256, %s1, [#allocation3]
    $region9: #{tpu_custom_call.1} parent=1 // pred_fallthru
      _
    // Predicated region
    $region10: #{tpu_custom_call.1} parent=1 // pred_check
      _
    $region11: #{tpu_custom_call.1} parent=1 // pred_check_branch
      %29 = sbr.rel (0) target = $region13
    $region12: #{tpu_custom_call.1} parent=1 // pred_region
      %30 = dma.done [#allocation3], 256
    $region13: #{tpu_custom_call.1} parent=1 // pred_fallthru
      _
    %31 = vsyncpa [#allocation3], 1

</llo_original>
